<compile_context>
chip_gen: v5e
topology: v5e:2x2
jax: 0.10.0
libtpu: 0.0.40
codegen_flags: <defaults>
</compile_context>

<pallas_src>
import functools
import math

import jax
import jax.numpy as jnp
from jax import lax
from jax.experimental import pallas as pl
from jax.experimental.pallas import tpu as pltpu


def _timestep_embedder_kernel(t_ref, w1_ref, b1_ref, w2_ref, b2_ref, o_ref,
                              *, max_period):
    # Static sizes.
    freq_dim = w1_ref.shape[0]          # frequency_embedding_size (even)
    half = freq_dim // 2

    # --- sinusoidal timestep embedding (all elementwise: VPU + EUP) ---------
    t = t_ref[...].astype(jnp.float32)                          # (TN, 1)
    j = lax.broadcasted_iota(jnp.int32, (1, half), 1).astype(jnp.float32)
    freqs = jnp.exp((-math.log(max_period) / half) * j)         # (1, half)
    args = t * freqs                                            # (TN, half)
    emb = jnp.concatenate([jnp.cos(args), jnp.sin(args)], axis=-1)  # (TN, F)
    # TODO(synk): odd frequency_embedding_size (extra zero column) not handled;
    #             default (256) and all practical configs are even.

    # --- MLP: Linear -> SiLU -> Linear (MXU + EUP) --------------------------
    # Feed the MXU operands in the weight's stored dtype; accumulate in f32.
    h = jnp.dot(emb.astype(w1_ref.dtype), w1_ref[...],
                preferred_element_type=jnp.float32) + b1_ref[...]   # (TN, H)
    h = h * jax.nn.sigmoid(h)                                       # SiLU (EUP)
    out = jnp.dot(h.astype(w2_ref.dtype), w2_ref[...],
                  preferred_element_type=jnp.float32) + b2_ref[...]  # (TN, H)

    o_ref[...] = out.astype(o_ref.dtype)


def timestep_embedder(t, params, *, max_period=10000.0, block_n=256):
    """t: (N,) float timesteps -> (N, hidden_size) embedding.

    params:
      w1: (freq_dim, hidden)   b1: (hidden,)     -- first Linear (in, out) layout
      w2: (hidden, hidden)     b2: (hidden,)     -- second Linear
    """
    N = t.shape[0]
    w1, w2 = params["w1"], params["w2"]
    freq_dim, H = w1.shape
    assert freq_dim % 2 == 0, "frequency_embedding_size must be even"
    b1 = params["b1"].reshape(1, H)
    b2 = params["b2"].reshape(1, H)
    out_dtype = w2.dtype

    # Sublane-aligned batch tile; tile N so VMEM stays bounded and the grid has
    # enough points to shard across cores when N is large.
    n_rounded = -(-N // 8) * 8
    TN = min(block_n, n_rounded)
    N_pad = -(-N // TN) * TN
    t2 = t.reshape(N, 1).astype(jnp.float32)
    if N_pad != N:
        t2 = jnp.pad(t2, ((0, N_pad - N), (0, 0)))

    out = pl.pallas_call(
        functools.partial(_timestep_embedder_kernel, max_period=max_period),
        out_shape=jax.ShapeDtypeStruct((N_pad, H), out_dtype),
        grid_spec=pltpu.PrefetchScalarGridSpec(
            num_scalar_prefetch=0,
            grid=(N_pad // TN,),
            in_specs=[
                pl.BlockSpec((TN, 1), lambda i: (i, 0)),          # t
                pl.BlockSpec((freq_dim, H), lambda i: (0, 0)),    # w1 (resident)
                pl.BlockSpec((1, H), lambda i: (0, 0)),           # b1
                pl.BlockSpec((H, H), lambda i: (0, 0)),           # w2 (resident)
                pl.BlockSpec((1, H), lambda i: (0, 0)),           # b2
            ],
            out_specs=pl.BlockSpec((TN, H), lambda i: (i, 0)),    # lane-dense out
        ),
        compiler_params=pltpu.CompilerParams(
            dimension_semantics=("parallel",)),
    )(t2, w1, b1, w2, b2)

    return out[:N] if N_pad != N else out


def timestep_embedder_ref(t, params, *, max_period=10000.0):
    """Pure-JAX reference matching the PyTorch module."""
    freq_dim = params["w1"].shape[0]
    half = freq_dim // 2
    freqs = jnp.exp(-math.log(max_period)
                    * jnp.arange(half, dtype=jnp.float32) / half)
    args = t[:, None].astype(jnp.float32) * freqs[None, :]
    emb = jnp.concatenate([jnp.cos(args), jnp.sin(args)], axis=-1)
    h = emb @ params["w1"] + params["b1"]
    h = h * jax.nn.sigmoid(h)                      # SiLU
    return h @ params["w2"] + params["b2"]


if __name__ == "__main__":
    # Small shapes consistent with the module: 8 timesteps, default
    # frequency_embedding_size=256, hidden_size=128 (lane-dense output).
    N, FREQ, H = 8, 256, 128

    key = jax.random.PRNGKey(0)
    kt, k1, k2 = jax.random.split(key, 3)

    t = jax.random.uniform(kt, (N,), dtype=jnp.float32,
                           minval=0.0, maxval=1000.0)

    # Deterministic parameter init (PyTorch Linear layout transposed to (in, out)).
    params = {
        "w1": 0.02 * jax.random.normal(k1, (FREQ, H), dtype=jnp.float32),
        "b1": jnp.zeros((H,), jnp.float32),
        "w2": 0.02 * jax.random.normal(k2, (H, H), dtype=jnp.float32),
        "b2": jnp.zeros((H,), jnp.float32),
    }

    out = timestep_embedder(t, params)
    out = jax.block_until_ready(out)

    ref = timestep_embedder_ref(t, params)
    assert out.shape == (N, H)
    assert jnp.allclose(out, ref, atol=1e-4, rtol=1e-3), "mismatch vs reference"

    print("KERNEL_OK")
</pallas_src>

<mosaic_0001>
module attributes {stable_mosaic.version = 11 : i64} {
  func.func @_timestep_embedder_kernel(%arg0: i32, %arg1: memref<8x1xf32, #tpu.memory_space<vmem>>, %arg2: memref<256x128xf32, #tpu.memory_space<vmem>>, %arg3: memref<1x128xf32, #tpu.memory_space<vmem>>, %arg4: memref<128x128xf32, #tpu.memory_space<vmem>>, %arg5: memref<1x128xf32, #tpu.memory_space<vmem>>, %arg6: memref<8x128xf32, #tpu.memory_space<vmem>>) attributes {dimension_semantics = [#tpu.dimension_semantics<parallel>], iteration_bounds = array<i64: 1>, scalar_prefetch = 0 : i64, scratch_operands = 0 : i64, tpu.core_type = #tpu.core_type<tc>, window_params = [{transform_indices = @transform_0, window_bounds = array<i64: 8, 1>}, {pipeline_mode = #tpu.pipeline_mode<synchronous>, transform_indices = @transform_1, window_bounds = array<i64: 256, 128>}, {pipeline_mode = #tpu.pipeline_mode<synchronous>, transform_indices = @transform_2, window_bounds = array<i64: 1, 128>}, {pipeline_mode = #tpu.pipeline_mode<synchronous>, transform_indices = @transform_3, window_bounds = array<i64: 128, 128>}, {pipeline_mode = #tpu.pipeline_mode<synchronous>, transform_indices = @transform_4, window_bounds = array<i64: 1, 128>}, {transform_indices = @transform_5, window_bounds = array<i64: 8, 128>}]} {
    %c0 = arith.constant 0 : index
    %c0_0 = arith.constant 0 : index
    %0 = vector.load %arg1[%c0, %c0_0] : memref<8x1xf32, #tpu.memory_space<vmem>>, vector<8x1xf32>
    %1 = tpu.iota {dimensions = array<i32: 1>} : vector<1x128xi32>
    %2 = arith.sitofp %1 : vector<1x128xi32> to vector<1x128xf32>
    %cst = arith.constant -0.0719557852 : f32
    %3 = vector.broadcast %cst : f32 to vector<1x128xf32>
    %4 = arith.mulf %3, %2 : vector<1x128xf32>
    %5 = math.exp %4 : vector<1x128xf32>
    %6 = vector.broadcast %0 : vector<8x1xf32> to vector<8x128xf32>
    %7 = vector.broadcast %5 : vector<1x128xf32> to vector<8x128xf32>
    %8 = arith.mulf %6, %7 : vector<8x128xf32>
    %9 = math.cos %8 : vector<8x128xf32>
    %10 = math.sin %8 : vector<8x128xf32>
    %11 = tpu.concatenate %9, %10 in 1 : vector<8x128xf32>, vector<8x128xf32> -> vector<8x256xf32>
    %c0_1 = arith.constant 0 : index
    %c0_2 = arith.constant 0 : index
    %12 = vector.load %arg2[%c0_1, %c0_2] : memref<256x128xf32, #tpu.memory_space<vmem>>, vector<256x128xf32>
    %cst_3 = arith.constant dense<0.000000e+00> : vector<8x128xf32>
    %13 = tpu.matmul %11, %12, %cst_3 {dimension_numbers = #tpu.dot_dimension_numbers<[1], [0], [0], [1], [0, 0, 1, 1], [], []>} : vector<8x256xf32>, vector<256x128xf32>, vector<8x128xf32> -> vector<8x128xf32>
    %c0_4 = arith.constant 0 : index
    %c0_5 = arith.constant 0 : index
    %14 = vector.load %arg3[%c0_4, %c0_5] : memref<1x128xf32, #tpu.memory_space<vmem>>, vector<1x128xf32>
    %15 = vector.broadcast %14 : vector<1x128xf32> to vector<8x128xf32>
    %16 = arith.addf %13, %15 : vector<8x128xf32>
    %17 = arith.negf %16 : vector<8x128xf32>
    %18 = math.exp %17 : vector<8x128xf32>
    %cst_6 = arith.constant 1.000000e+00 : f32
    %19 = vector.broadcast %cst_6 : f32 to vector<8x128xf32>
    %20 = arith.addf %19, %18 : vector<8x128xf32>
    %21 = arith.divf %19, %20 : vector<8x128xf32>
    %22 = arith.mulf %16, %21 : vector<8x128xf32>
    %c0_7 = arith.constant 0 : index
    %c0_8 = arith.constant 0 : index
    %23 = vector.load %arg4[%c0_7, %c0_8] : memref<128x128xf32, #tpu.memory_space<vmem>>, vector<128x128xf32>
    %cst_9 = arith.constant dense<0.000000e+00> : vector<8x128xf32>
    %24 = tpu.matmul %22, %23, %cst_9 {dimension_numbers = #tpu.dot_dimension_numbers<[1], [0], [0], [1], [0, 0, 1, 1], [], []>} : vector<8x128xf32>, vector<128x128xf32>, vector<8x128xf32> -> vector<8x128xf32>
    %c0_10 = arith.constant 0 : index
    %c0_11 = arith.constant 0 : index
    %25 = vector.load %arg5[%c0_10, %c0_11] : memref<1x128xf32, #tpu.memory_space<vmem>>, vector<1x128xf32>
    %26 = vector.broadcast %25 : vector<1x128xf32> to vector<8x128xf32>
    %27 = arith.addf %24, %26 : vector<8x128xf32>
    %c0_12 = arith.constant 0 : index
    %c0_13 = arith.constant 0 : index
    %28 = vector.load %arg6[%c0_12, %c0_13] : memref<8x128xf32, #tpu.memory_space<vmem>>, vector<8x128xf32>
    tpu.vector_store %arg6[%c0_12, %c0_13], %27 {strides = array<i32>} : memref<8x128xf32, #tpu.memory_space<vmem>>, vector<8x128xf32>,
    return
  }
  func.func @transform_0(%arg0: i32) -> (i32, i32) {
    %c0_i32 = arith.constant 0 : i32
    %c0_i32_0 = arith.constant 0 : i32
    return %arg0, %c0_i32 : i32, i32
  }
  func.func @transform_1(%arg0: i32) -> (i32, i32) {
    %c0_i32 = arith.constant 0 : i32
    %c0_i32_0 = arith.constant 0 : i32
    %c0_i32_1 = arith.constant 0 : i32
    return %c0_i32, %c0_i32_0 : i32, i32
  }
  func.func @transform_2(%arg0: i32) -> (i32, i32) {
    %c0_i32 = arith.constant 0 : i32
    %c0_i32_0 = arith.constant 0 : i32
    %c0_i32_1 = arith.constant 0 : i32
    return %c0_i32, %c0_i32_0 : i32, i32
  }
  func.func @transform_3(%arg0: i32) -> (i32, i32) {
    %c0_i32 = arith.constant 0 : i32
    %c0_i32_0 = arith.constant 0 : i32
    %c0_i32_1 = arith.constant 0 : i32
    return %c0_i32, %c0_i32_0 : i32, i32
  }
  func.func @transform_4(%arg0: i32) -> (i32, i32) {
    %c0_i32 = arith.constant 0 : i32
    %c0_i32_0 = arith.constant 0 : i32
    %c0_i32_1 = arith.constant 0 : i32
    return %c0_i32, %c0_i32_0 : i32, i32
  }
  func.func @transform_5(%arg0: i32) -> (i32, i32) {
    %c0_i32 = arith.constant 0 : i32
    %c0_i32_0 = arith.constant 0 : i32
    return %arg0, %c0_i32 : i32, i32
  }
}

</mosaic_0001>

<llo_original>
// kernel: tpu_custom_call.1
$region0: #{tpu_custom_call.1}
  #allocation0 [shape = 'u32[]', space=smem, size = 0x4, offset = 0x4, fixed_abs, tag = 'smem constant byte address 0x4 - core index']
  #allocation1 [shape = 'u32[72,128]{1,0:T(1,128)}', space=vmem, size = 0x9000, scoped, tag = 'internal scratch']
  %s0 = inlined_call_operand.vmem [shape: f32[8,1], index: 0, kind: input, shape index: {}]
  %s1 = inlined_call_operand.hbm [shape: f32[256,128], index: 1, kind: input, shape index: {}]
  %s2 = inlined_call_operand.vmem [shape: f32[1,128], index: 2, kind: input, shape index: {}]
  %s3 = inlined_call_operand.hbm [shape: f32[128,128], index: 3, kind: input, shape index: {}]
  %s4 = inlined_call_operand.vmem [shape: f32[1,128], index: 4, kind: input, shape index: {}]
  %s5 = inlined_call_operand.hbm [shape: f32[8,128], index: 5, kind: output, shape index: {}]
  %s6 = sld [smem:[#allocation0]]
  $region38: #{tpu_custom_call.1} parent=0
    _
  %s8 = ssub.s32 1, %s6
  %s9 = scalar_select 0, %s8, %s6
  $region1: #{tpu_custom_call.1} parent=0
    #allocation2 [shape = 'u8[131072]{0}', space=vmem, size = 0x20000, scoped, tag = 'input window, operand 1, single buffered']
    #allocation3 [shape = 's32[1]{0}', space=sflag, size = 0x4, scoped, tag = 'scoped memory for tpu_custom_call.1']
    #allocation4 [shape = 's32[1]{0}', space=sflag, size = 0x4, scoped, tag = 'scoped memory for tpu_custom_call.1']
    #allocation5 [shape = 'u8[65536]{0}', space=vmem, size = 0x10000, scoped, tag = 'input window, operand 3, single buffered']
    #allocation6 [shape = 's32[1]{0}', space=sflag, size = 0x4, scoped, tag = 'scoped memory for tpu_custom_call.1']
    #allocation7 [shape = 'u8[4096]{0}', space=vmem, size = 0x1000, scoped, tag = 'output window, operand 0, single buffered']
    %10 = vsyncpa [#allocation3], 0
    %11 = vsyncpa [#allocation6], 0
    %12 = vsyncpa [#allocation4], 0
    // Predicated region
    $region2: #{tpu_custom_call.1} parent=1 // pred_check
      _
    $region3: #{tpu_custom_call.1} parent=1 // pred_check_branch
      %14 = sbr.rel (0) target = $region5
    $region4: #{tpu_custom_call.1} parent=1 // pred_region
      _
    $region5: #{tpu_custom_call.1} parent=1 // pred_fallthru
      _
    // Predicated region
    $region6: #{tpu_custom_call.1} parent=1 // pred_check
      _
    $region7: #{tpu_custom_call.1} parent=1 // pred_check_branch
      %16 = sbr.rel (0) target = $region9
    $region8: #{tpu_custom_call.1} parent=1 // pred_region
      %18 = vsyncadd [#allocation3], 0
      %s19 = sshll.u32 %s1, 4
      %s20 = int_to_ptr.hbm [resolvable:$true] %s19
      %s21 = sshll.u32 [#allocation2], 4
      %s22 = int_to_ptr.vmem [resolvable:$true] %s21
      %27 = dma.hbm_to_vmem [thread:$0]  %s20, 4096, %s22, [#allocation3], 128, 128, 8
    $region9: #{tpu_custom_call.1} parent=1 // pred_fallthru
      _
    // Predicated region
    $region10: #{tpu_custom_call.1} parent=1 // pred_check
      _
    $region11: #{tpu_custom_call.1} parent=1 // pred_check_branch
      %29 = sbr.rel (0) target = $region13
    $region12: #{tpu_custom_call.1} parent=1 // pred_region
      _
    $region13: #{tpu_custom_call.1} parent=1 // pred_fallthru
      _
    // Predicated region
    $region14: #{tpu_custom_call.1} parent=1 // pred_check
      _
    $region15: #{tpu_custom_call.1} parent=1 // pred_check_branch
      %31 = sbr.rel (0) target = $region17
    $region16: #{tpu_custom_call.1} parent=1 // pred_region
      %33 = vsyncadd [#allocation6], 0
      %s34 = sshll.u32 %s3, 4
      %s35 = int_to_ptr.hbm [resolvable:$true] %s34
      %s36 = sshll.u32 [#allocation5], 4
      %s37 = int_to_ptr.vmem [resolvable:$true] %s36
      %42 = dma.hbm_to_vmem [thread:$0]  %s35, 2048, %s37, [#allocation6], 128, 128, 8
    $region17: #{tpu_custom_call.1} parent=1 // pred_fallthru
      _
    // Predicated region
    $region18: #{tpu_custom_call.1} parent=1 // pred_check
      _
    $region19: #{tpu_custom_call.1} parent=1 // pred_check_branch
      %44 = sbr.rel (0) target = $region21
    $region20: #{tpu_custom_call.1} parent=1 // pred_region
      _
    $region21: #{tpu_custom_call.1} parent=1 // pred_fallthru
      _
    // Predicated region
    $region22: #{tpu_custom_call.1} parent=1 // pred_check
      _
    $region23: #{tpu_custom_call.1} parent=1 // pred_check_branch
      %46 = sbr.rel (0) target = $region25
    $region24: #{tpu_custom_call.1} parent=1 // pred_region
      %48 = dma.done [#allocation3], 4096
    $region25: #{tpu_custom_call.1} parent=1 // pred_fallthru
      _
    // Predicated region
    $region26: #{tpu_custom_call.1} parent=1 // pred_check
      _
    $region27: #{tpu_custom_call.1} parent=1 // pred_check_branch
      %50 = sbr.rel (0) target = $region29
    $region28: #{tpu_custom_call.1} parent=1 // pred_region
      %52 = dma.done [#allocation6], 2048
    $region29: #{tpu_custom_call.1} parent=1 // pred_fallthru
      _
    %v53 = vld [vmem:[%s0] sm:$0xff]
    %v54 = vlaneseq
    %v55 = vand.u32 %v54, 127
    %v56 = vcvt.s32.f32 %v55
    %v57 = vmul.f32 %v56, -0.071955785
    %v58 = vmul.f32 %v57, 1.442695
    %v59 = vpow.pop %v58
    %61 = vset.pattern.permute.xlu0 0
    %62 = vperm.xlu0 %61, %v53
    %v63 = vpop.permute.xlu0 %62
    %v65 = vmul.f32 %v63, %v59
    %v66 = vand.u32 2147483647, %v65
    %vm67 = vcmp.le.f32.partialorder %v66, 0.7853982
    %vm68 = vcmp.lt.s32.totalorder %v65, 0
    %v69 = vand.u32 %v65, 2139095040
    %v70 = vshrl.u32 %v69, 23
    %v71 = vsub.s32 %v70, 127
    %v72 = vand.u32 2147483647, %v65
    %v73 = vand.u32 %v72, 8388607
    %v74 = vor.u32 %v73, 8388608
    %v75 = vsub.s32 0, %v74
    %v76 = vadd.s32 %v71, 1
    %vm77 = vcmp.gt.s32.totalorder %v76, 0
    %v78 = vsel %vm77, %v76, 0
    %v79 = vshrl.u32 %v78, 5
    %v80 = vand.u32 %v78, 31
    %v81 = vsub.s32 32, %v80
    %v82 = vshrl.u32 683565275, %v81
    %v83 = vshll.u32 683565275, %v80
    %v84 = vshrl.u32 2475754826, %v81
    %v85 = vor.u32 %v83, %v84
    %v86 = vshll.u32 2475754826, %v80
    %v87 = vshrl.u32 2131351028, %v81
    %v88 = vor.u32 %v86, %v87
    %v89 = vshll.u32 2131351028, %v80
    %v90 = vshrl.u32 2102212464, %v81
    %v91 = vor.u32 %v89, %v90
    %v92 = vshll.u32 2102212464, %v80
    %v93 = vshrl.u32 920167782, %v81
    %v94 = vor.u32 %v92, %v93
    %v95 = vshll.u32 920167782, %v80
    %v96 = vshrl.u32 1326507024, %v81
    %v97 = vor.u32 %v95, %v96
    %vm98 = vcmp.lt.s32.totalorder %v79, 1
    %vm99 = vcmp.lt.s32.totalorder %v79, 2
    %vm100 = vcmp.lt.s32.totalorder %v79, 3
    %vm101 = vcmp.lt.s32.totalorder %v79, 4
    %v102 = vsel %vm98, %v82, %v85
    %v103 = vsel %vm101, %v91, 2102212464
    %v104 = vsel %vm100, %v88, %v103
    %v105 = vsel %vm99, %v102, %v104
    %v106 = vsel %vm98, %v85, %v88
    %v107 = vsel %vm101, %v94, 920167782
    %v108 = vsel %vm100, %v91, %v107
    %v109 = vsel %vm99, %v106, %v108
    %v110 = vsel %vm98, %v88, %v91
    %v111 = vsel %vm101, %v97, 1326507024
    %v112 = vsel %vm100, %v94, %v111
    %v113 = vsel %vm99, %v110, %v112
    %v114 = vshll.u32 %v74, 8
    %v115 = vand.u32 %v114, 65535
    %v116 = vshrl.u32 %v114, 16
    %v117 = vand.u32 %v113, 65535
    %v118 = vshrl.u32 %v113, 16
    %v119 = vmul.u32 %v115, %v117
    %v120 = vmul.u32 %v115, %v118
    %v121 = vmul.u32 %v116, %v117
    %v122 = vmul.u32 %v116, %v118
    %v123 = vshll.u32 %v120, 16
    %v124 = vshrl.u32 %v120, 16
    %v125 = vshll.u32 %v121, 16
    %v126 = vshrl.u32 %v121, 16
    %vm127 = vc.u32 %v119, %v123
    %v128 = vsel %vm127, 1, 0
    %v129 = vadd.s32 %v119, %v123
    %v130 = vadd.s32 %v122, %v128
    %vm131 = vc.u32 %v129, %v125
    %v132 = vsel %vm131, 1, 0
    %v133 = vadd.s32 %v129, %v125
    %v134 = vadd.s32 %v130, %v132
    %v135 = vadd.s32 %v134, %v124
    %v136 = vadd.s32 %v135, %v126
    %v137 = vand.u32 %v114, 65535
    %v138 = vshrl.u32 %v114, 16
    %v139 = vand.u32 %v109, 65535
    %v140 = vshrl.u32 %v109, 16
    %v141 = vmul.u32 %v137, %v139
    %v142 = vmul.u32 %v137, %v140
    %v143 = vmul.u32 %v138, %v139
    %v144 = vmul.u32 %v138, %v140
    %v145 = vshll.u32 %v142, 16
    %v146 = vshrl.u32 %v142, 16
    %v147 = vshll.u32 %v143, 16
    %v148 = vshrl.u32 %v143, 16
    %vm149 = vc.u32 %v141, %v145
    %v150 = vsel %vm149, 1, 0
    %v151 = vadd.s32 %v141, %v145
    %v152 = vadd.s32 %v144, %v150
    %vm153 = vc.u32 %v151, %v147
    %v154 = vsel %vm153, 1, 0
    %v155 = vadd.s32 %v151, %v147
    %v156 = vadd.s32 %v152, %v154
    %v157 = vadd.s32 %v156, %v146
    %v158 = vadd.s32 %v157, %v148
    %v159 = vmul.u32 %v114, %v105
    %v160 = vadd.s32 %v136, %v155
    %vm161 = vc.u32 %v136, %v155
    %v162 = vadd.s32 %v158, 1
    %v163 = vsel %vm161, %v162, %v158
    %v164 = vadd.s32 %v159, %v163
    %v165 = vadd.s32 %v164, 536870912
    %v166 = vshrl.u32 %v165, 30
    %v167 = vshll.u32 %v166, 30
    %v168 = vsub.s32 %v164, %v167
    %vm169 = vcmp.lt.s32.totalorder %v168, 0
    %v170 = vsub.s32 0, %v168
    %v171 = vsel %vm169, %v170, %v168
    %v172 = vclz %v171
    %v173 = vsub.s32 %v172, 2
    %vm174 = vcmp.gt.s32.totalorder 0, %v173
    %v175 = vsel %vm174, 0, %v173
    %v176 = vsub.s32 32, %v175
    %v177 = vshll.u32 %v168, %v175
    %v178 = vshrl.u32 %v160, %v176
    %v179 = vor.u32 %v177, %v178
    %v180 = vsub.s32 4294967266, %v175
    %v181 = vadd.s32 %v180, 127
    %v182 = vshll.u32 %v181, 23
    %v183 = vor.u32 4788187, %v182
    %v184 = vand.u32 2147483647, %v183
    %v186 = vcvt.s32.f32 %v179
    %v187 = vmul.f32 %v186, %v184
    %v188 = vxor.u32 %v187, 2147483648
    %v189 = vsel %vm68, %v188, %v187
    %v190 = vsub.s32 4, %v166
    %v191 = vsel %vm68, %v190, %v166
    %v192 = vsel %vm67, %v65, %v189
    %v193 = vsel %vm67, 0, %v191
    %v194 = vmul.f32 %v192, %v192
    %v195 = vmul.f32 %v194, -0.001358992
    %v196 = vadd.f32 %v195, 0.041655596
    %v197 = vmul.f32 %v194, %v196
    %v198 = vadd.f32 %v197, -0.4999988
    %v199 = vmul.f32 %v194, %v198
    %v200 = vadd.f32 1.0, %v199
    %v201 = vmul.f32 %v192, %v192
    %v202 = vmul.f32 %v201, -0.00019511016
    %v203 = vadd.f32 %v202, 0.008332121
    %v204 = vmul.f32 %v201, %v203
    %v205 = vadd.f32 %v204, -0.16666654
    %v206 = vmul.f32 %v201, %v205
    %v207 = vadd.f32 %v206, 1.0
    %v208 = vmul.f32 %v207, %v192
    %vm209 = vweird.f32 %v65
    %v210 = vand.u32 %v193, 3
    %vm211 = vcmp.lt.s32.totalorder %v210, 2
    %vm212 = vcmp.eq.s32.totalorder %v210, 0
    %v213 = vxor.u32 %v208, 2147483648
    %v214 = vsel %vm212, %v200, %v213
    %vm215 = vcmp.eq.s32.totalorder %v210, 2
    %v216 = vxor.u32 %v200, 2147483648
    %v217 = vsel %vm215, %v216, %v208
    %v218 = vsel %vm211, %v214, %v217
    %v219 = vsel %vm209, nan, %v218
    %v220 = vand.u32 2147483647, %v65
    %vm221 = vcmp.le.f32.partialorder %v220, 0.7853982
    %vm222 = vcmp.lt.s32.totalorder %v65, 0
    %v223 = vand.u32 %v65, 2139095040
    %v224 = vshrl.u32 %v223, 23
    %v225 = vsub.s32 %v224, 127
    %v226 = vand.u32 2147483647, %v65
    %v227 = vand.u32 %v226, 8388607
    %v228 = vor.u32 %v227, 8388608
    %v229 = vsub.s32 0, %v228
    %v230 = vadd.s32 %v225, 1
    %vm231 = vcmp.gt.s32.totalorder %v230, 0
    %v232 = vsel %vm231, %v230, 0
    %v233 = vshrl.u32 %v232, 5
    %v234 = vand.u32 %v232, 31
    %v235 = vsub.s32 32, %v234
    %v236 = vshrl.u32 683565275, %v235
    %v237 = vshll.u32 683565275, %v234
    %v238 = vshrl.u32 2475754826, %v235
    %v239 = vor.u32 %v237, %v238
    %v240 = vshll.u32 2475754826, %v234
    %v241 = vshrl.u32 2131351028, %v235
    %v242 = vor.u32 %v240, %v241
    %v243 = vshll.u32 2131351028, %v234
    %v244 = vshrl.u32 2102212464, %v235
    %v245 = vor.u32 %v243, %v244
    %v246 = vshll.u32 2102212464, %v234
    %v247 = vshrl.u32 920167782, %v235
    %v248 = vor.u32 %v246, %v247
    %v249 = vshll.u32 920167782, %v234
    %v250 = vshrl.u32 1326507024, %v235
    %v251 = vor.u32 %v249, %v250
    %vm252 = vcmp.lt.s32.totalorder %v233, 1
    %vm253 = vcmp.lt.s32.totalorder %v233, 2
    %vm254 = vcmp.lt.s32.totalorder %v233, 3
    %vm255 = vcmp.lt.s32.totalorder %v233, 4
    %v256 = vsel %vm252, %v236, %v239
    %v257 = vsel %vm255, %v245, 2102212464
    %v258 = vsel %vm254, %v242, %v257
    %v259 = vsel %vm253, %v256, %v258
    %v260 = vsel %vm252, %v239, %v242
    %v261 = vsel %vm255, %v248, 920167782
    %v262 = vsel %vm254, %v245, %v261
    %v263 = vsel %vm253, %v260, %v262
    %v264 = vsel %vm252, %v242, %v245
    %v265 = vsel %vm255, %v251, 1326507024
    %v266 = vsel %vm254, %v248, %v265
    %v267 = vsel %vm253, %v264, %v266
    %v268 = vshll.u32 %v228, 8
    %v269 = vand.u32 %v268, 65535
    %v270 = vshrl.u32 %v268, 16
    %v271 = vand.u32 %v267, 65535
    %v272 = vshrl.u32 %v267, 16
    %v273 = vmul.u32 %v269, %v271
    %v274 = vmul.u32 %v269, %v272
    %v275 = vmul.u32 %v270, %v271
    %v276 = vmul.u32 %v270, %v272
    %v277 = vshll.u32 %v274, 16
    %v278 = vshrl.u32 %v274, 16
    %v279 = vshll.u32 %v275, 16
    %v280 = vshrl.u32 %v275, 16
    %vm281 = vc.u32 %v273, %v277
    %v282 = vsel %vm281, 1, 0
    %v283 = vadd.s32 %v273, %v277
    %v284 = vadd.s32 %v276, %v282
    %vm285 = vc.u32 %v283, %v279
    %v286 = vsel %vm285, 1, 0
    %v287 = vadd.s32 %v283, %v279
    %v288 = vadd.s32 %v284, %v286
    %v289 = vadd.s32 %v288, %v278
    %v290 = vadd.s32 %v289, %v280
    %v291 = vand.u32 %v268, 65535
    %v292 = vshrl.u32 %v268, 16
    %v293 = vand.u32 %v263, 65535
    %v294 = vshrl.u32 %v263, 16
    %v295 = vmul.u32 %v291, %v293
    %v296 = vmul.u32 %v291, %v294
    %v297 = vmul.u32 %v292, %v293
    %v298 = vmul.u32 %v292, %v294
    %v299 = vshll.u32 %v296, 16
    %v300 = vshrl.u32 %v296, 16
    %v301 = vshll.u32 %v297, 16
    %v302 = vshrl.u32 %v297, 16
    %vm303 = vc.u32 %v295, %v299
    %v304 = vsel %vm303, 1, 0
    %v305 = vadd.s32 %v295, %v299
    %v306 = vadd.s32 %v298, %v304
    %vm307 = vc.u32 %v305, %v301
    %v308 = vsel %vm307, 1, 0
    %v309 = vadd.s32 %v305, %v301
    %v310 = vadd.s32 %v306, %v308
    %v311 = vadd.s32 %v310, %v300
    %v312 = vadd.s32 %v311, %v302
    %v313 = vmul.u32 %v268, %v259
    %v314 = vadd.s32 %v290, %v309
    %vm315 = vc.u32 %v290, %v309
    %v316 = vadd.s32 %v312, 1
    %v317 = vsel %vm315, %v316, %v312
    %v318 = vadd.s32 %v313, %v317
    %v319 = vadd.s32 %v318, 536870912
    %v320 = vshrl.u32 %v319, 30
    %v321 = vshll.u32 %v320, 30
    %v322 = vsub.s32 %v318, %v321
    %vm323 = vcmp.lt.s32.totalorder %v322, 0
    %v324 = vsub.s32 0, %v322
    %v325 = vsel %vm323, %v324, %v322
    %v326 = vclz %v325
    %v327 = vsub.s32 %v326, 2
    %vm328 = vcmp.gt.s32.totalorder 0, %v327
    %v329 = vsel %vm328, 0, %v327
    %v330 = vsub.s32 32, %v329
    %v331 = vshll.u32 %v322, %v329
    %v332 = vshrl.u32 %v314, %v330
    %v333 = vor.u32 %v331, %v332
    %v334 = vsub.s32 4294967266, %v329
    %v335 = vadd.s32 %v334, 127
    %v336 = vshll.u32 %v335, 23
    %v337 = vor.u32 4788187, %v336
    %v338 = vand.u32 2147483647, %v337
    %v340 = vcvt.s32.f32 %v333
    %v341 = vmul.f32 %v340, %v338
    %v342 = vxor.u32 %v341, 2147483648
    %v343 = vsel %vm222, %v342, %v341
    %v344 = vsub.s32 4, %v320
    %v345 = vsel %vm222, %v344, %v320
    %v346 = vsel %vm221, %v65, %v343
    %v347 = vsel %vm221, 0, %v345
    %v348 = vmul.f32 %v346, %v346
    %v349 = vmul.f32 %v348, -0.001358992
    %v350 = vadd.f32 %v349, 0.041655596
    %v351 = vmul.f32 %v348, %v350
    %v352 = vadd.f32 %v351, -0.4999988
    %v353 = vmul.f32 %v348, %v352
    %v354 = vadd.f32 1.0, %v353
    %v355 = vmul.f32 %v346, %v346
    %v356 = vmul.f32 %v355, -0.00019511016
    %v357 = vadd.f32 %v356, 0.008332121
    %v358 = vmul.f32 %v355, %v357
    %v359 = vadd.f32 %v358, -0.16666654
    %v360 = vmul.f32 %v355, %v359
    %v361 = vadd.f32 %v360, 1.0
    %v362 = vmul.f32 %v361, %v346
    %vm363 = vweird.f32 %v65
    %v364 = vadd.s32 %v347, 3
    %v365 = vand.u32 %v364, 3
    %vm366 = vcmp.lt.s32.totalorder %v365, 2
    %vm367 = vcmp.eq.s32.totalorder %v365, 0
    %v368 = vxor.u32 %v362, 2147483648
    %v369 = vsel %vm367, %v354, %v368
    %vm370 = vcmp.eq.s32.totalorder %v365, 2
    %v371 = vxor.u32 %v354, 2147483648
    %v372 = vsel %vm370, %v371, %v362
    %v373 = vsel %vm366, %v369, %v372
    %v374 = vsel %vm363, nan, %v373
    %v375 = vld [vmem:[#allocation2] sm:$0xff]
    %v376 = vld [vmem:[#allocation2 + $0x8] sm:$0xff]
    %v377 = vld [vmem:[#allocation2 + $0x10] sm:$0xff]
    %v378 = vld [vmem:[#allocation2 + $0x18] sm:$0xff]
    %v379 = vld [vmem:[#allocation2 + $0x20] sm:$0xff]
    %v380 = vld [vmem:[#allocation2 + $0x28] sm:$0xff]
    %v381 = vld [vmem:[#allocation2 + $0x30] sm:$0xff]
    %v382 = vld [vmem:[#allocation2 + $0x38] sm:$0xff]
    %v383 = vld [vmem:[#allocation2 + $0x40] sm:$0xff]
    %v384 = vld [vmem:[#allocation2 + $0x48] sm:$0xff]
    %v385 = vld [vmem:[#allocation2 + $0x50] sm:$0xff]
    %v386 = vld [vmem:[#allocation2 + $0x58] sm:$0xff]
    %v387 = vld [vmem:[#allocation2 + $0x60] sm:$0xff]
    %v388 = vld [vmem:[#allocation2 + $0x68] sm:$0xff]
    %v389 = vld [vmem:[#allocation2 + $0x70] sm:$0xff]
    %v390 = vld [vmem:[#allocation2 + $0x78] sm:$0xff]
    %v391 = vld [vmem:[#allocation2 + $0x80] sm:$0xff]
    %v392 = vld [vmem:[#allocation2 + $0x88] sm:$0xff]
    %v393 = vld [vmem:[#allocation2 + $0x90] sm:$0xff]
    %v394 = vld [vmem:[#allocation2 + $0x98] sm:$0xff]
    %v395 = vld [vmem:[#allocation2 + $0xa0] sm:$0xff]
    %v396 = vld [vmem:[#allocation2 + $0xa8] sm:$0xff]
    %v397 = vld [vmem:[#allocation2 + $0xb0] sm:$0xff]
    %v398 = vld [vmem:[#allocation2 + $0xb8] sm:$0xff]
    %v399 = vld [vmem:[#allocation2 + $0xc0] sm:$0xff]
    %v400 = vld [vmem:[#allocation2 + $0xc8] sm:$0xff]
    %v401 = vld [vmem:[#allocation2 + $0xd0] sm:$0xff]
    %v402 = vld [vmem:[#allocation2 + $0xd8] sm:$0xff]
    %v403 = vld [vmem:[#allocation2 + $0xe0] sm:$0xff]
    %v404 = vld [vmem:[#allocation2 + $0xe8] sm:$0xff]
    %v405 = vld [vmem:[#allocation2 + $0xf0] sm:$0xff]
    %v406 = vld [vmem:[#allocation2 + $0xf8] sm:$0xff]
    %v407 = vld [vmem:[%s2] sm:$0x1]
    %v409 = vperm.slane %v407, 0
    %411 = vmatpush.msra.mxu0 %v390
    %412 = vmatpush.msra.mxu0 %v389
    %413 = vmatpush.msra.mxu0 %v388
    %414 = vmatpush.msra.mxu0 %v387
    %415 = vmatpush.msra.mxu0 %v386
    %416 = vmatpush.msra.mxu0 %v385
    %417 = vmatpush.msra.mxu0 %v384
    %418 = vmatpush.msra.mxu0 %v383
    %419 = vmatpush.msra.mxu0 %v382
    %420 = vmatpush.msra.mxu0 %v381
    %421 = vmatpush.msra.mxu0 %v380
    %422 = vmatpush.msra.mxu0 %v379
    %423 = vmatpush.msra.mxu0 %v378
    %424 = vmatpush.msra.mxu0 %v377
    %425 = vmatpush.msra.mxu0 %v376
    %426 = vmatpush.msra.mxu0 %v375
    %427 = vmatmul.f32.gmra.mxu0 %v219
    %v428 = vpop.f32.mrf.mxu0
    %v429 = vadd.f32 %v409, %v428
    %430 = vdwg.mxu0
    %431 = vmatpush.msra.mxu0 %v406
    %432 = vmatpush.msra.mxu0 %v405
    %433 = vmatpush.msra.mxu0 %v404
    %434 = vmatpush.msra.mxu0 %v403
    %435 = vmatpush.msra.mxu0 %v402
    %436 = vmatpush.msra.mxu0 %v401
    %437 = vmatpush.msra.mxu0 %v400
    %438 = vmatpush.msra.mxu0 %v399
    %439 = vmatpush.msra.mxu0 %v398
    %440 = vmatpush.msra.mxu0 %v397
    %441 = vmatpush.msra.mxu0 %v396
    %442 = vmatpush.msra.mxu0 %v395
    %443 = vmatpush.msra.mxu0 %v394
    %444 = vmatpush.msra.mxu0 %v393
    %445 = vmatpush.msra.mxu0 %v392
    %446 = vmatpush.msra.mxu0 %v391
    %447 = vmatmul.f32.gmra.mxu0 %v374
    %v448 = vpop.f32.mrf.mxu0
    %v449 = vadd.f32 %v429, %v448
    %450 = vdwg.mxu0
    %v451 = vxor.u32 %v449, 2147483648
    %v452 = vmul.f32 %v451, 1.442695
    %v453 = vpow.pop %v452
    %v454 = vadd.f32 %v453, 1.0
    %v455 = vrcp.pop %v454
    %v456 = vmul.f32 %v454, %v455
    %v457 = vsub.f32 1.0, %v456
    %v458 = vmul.f32 %v455, %v457
    %v459 = vadd.f32 %v455, %v458
    %vm460 = vweird.f32 %v454
    %vm461 = vweird.f32 %v455
    %vm462 = vmor %vm460, %vm461
    %v463 = vsel %vm462, %v455, %v459
    %v464 = vand.u32 2147483647, %v454
    %vm465 = vcmp.eq.f32.partialorder %v464, 8.507059e+37
    %v466 = vand.u32 %v454, 2147483648
    %v467 = vor.u32 1.1754944e-38, %v466
    %v468 = vsel %vm465, %v467, %v463
    %v469 = vmul.f32 1.0, %v468
    %v470 = vmul.f32 %v449, %v469
    %v471 = vld [vmem:[#allocation5] sm:$0xff]
    %v472 = vld [vmem:[#allocation5 + $0x8] sm:$0xff]
    %v473 = vld [vmem:[#allocation5 + $0x10] sm:$0xff]
    %v474 = vld [vmem:[#allocation5 + $0x18] sm:$0xff]
    %v475 = vld [vmem:[#allocation5 + $0x20] sm:$0xff]
    %v476 = vld [vmem:[#allocation5 + $0x28] sm:$0xff]
    %v477 = vld [vmem:[#allocation5 + $0x30] sm:$0xff]
    %v478 = vld [vmem:[#allocation5 + $0x38] sm:$0xff]
    %v479 = vld [vmem:[#allocation5 + $0x40] sm:$0xff]
    %v480 = vld [vmem:[#allocation5 + $0x48] sm:$0xff]
    %v481 = vld [vmem:[#allocation5 + $0x50] sm:$0xff]
    %v482 = vld [vmem:[#allocation5 + $0x58] sm:$0xff]
    %v483 = vld [vmem:[#allocation5 + $0x60] sm:$0xff]
    %v484 = vld [vmem:[#allocation5 + $0x68] sm:$0xff]
    %v485 = vld [vmem:[#allocation5 + $0x70] sm:$0xff]
    %v486 = vld [vmem:[#allocation5 + $0x78] sm:$0xff]
    %v487 = vld [vmem:[%s4] sm:$0x1]
    %v489 = vperm.slane %v487, 0
    %491 = vmatpush.msra.mxu0 %v486
    %492 = vmatpush.msra.mxu0 %v485
    %493 = vmatpush.msra.mxu0 %v484
    %494 = vmatpush.msra.mxu0 %v483
    %495 = vmatpush.msra.mxu0 %v482
    %496 = vmatpush.msra.mxu0 %v481
    %497 = vmatpush.msra.mxu0 %v480
    %498 = vmatpush.msra.mxu0 %v479
    %499 = vmatpush.msra.mxu0 %v478
    %500 = vmatpush.msra.mxu0 %v477
    %501 = vmatpush.msra.mxu0 %v476
    %502 = vmatpush.msra.mxu0 %v475
    %503 = vmatpush.msra.mxu0 %v474
    %504 = vmatpush.msra.mxu0 %v473
    %505 = vmatpush.msra.mxu0 %v472
    %506 = vmatpush.msra.mxu0 %v471
    %507 = vmatmul.f32.gmra.mxu0 %v470
    %v508 = vpop.f32.mrf.mxu0
    %v509 = vadd.f32 %v489, %v508
    %510 = vdwg.mxu0
    %511 = vst [vmem:[#allocation7] sm:$0xff] %v509
    // Predicated region
    $region30: #{tpu_custom_call.1} parent=1 // pred_check
      _
    $region31: #{tpu_custom_call.1} parent=1 // pred_check_branch
      %513 = sbr.rel (0) target = $region33
    $region32: #{tpu_custom_call.1} parent=1 // pred_region
      %515 = vsyncadd [#allocation4], 0
      %s517 = sshll.u32 [#allocation7], 4
      %s518 = int_to_ptr.vmem [resolvable:$true] %s517
      %s519 = sshll.u32 %s5, 4
      %s520 = int_to_ptr.hbm [resolvable:$true] %s519
      %522 = dma.vmem_to_hbm [thread:$0]  %s518, 128, %s520, [#allocation4]
    $region33: #{tpu_custom_call.1} parent=1 // pred_fallthru
      _
    // Predicated region
    $region34: #{tpu_custom_call.1} parent=1 // pred_check
      _
    $region35: #{tpu_custom_call.1} parent=1 // pred_check_branch
      %524 = sbr.rel (0) target = $region37
    $region36: #{tpu_custom_call.1} parent=1 // pred_region
      %526 = dma.done [#allocation4], 128
    $region37: #{tpu_custom_call.1} parent=1 // pred_fallthru
      _
    %527 = vsyncpa [#allocation3], 1
    %528 = vsyncpa [#allocation6], 1
    %529 = vsyncpa [#allocation4], 1

</llo_original>
